<compile_context>
chip_gen: v7x
topology: tpu7x:2x2x1
jax: 0.10.0
libtpu: 0.0.40
codegen_flags: <defaults>
</compile_context>

<pallas_src>
import functools

import jax
import jax.numpy as jnp
from jax.experimental import pallas as pl
from jax.experimental.pallas import tpu as pltpu

_LANE = 128
_SUBLANE = 8


def _round_up(n, m):
    return ((n + m - 1) // m) * m


def _mlp_kernel(x_ref, w1_ref, b1_ref, w2_ref, b2_ref, out_ref):
    """Fused fc1 -> relu -> fc2 on one batch tile.

    x_ref  : (TILE_B, D_in)  f32
    w1_ref : (D_in, Hp)      f32/bf16  (pre-transposed, lane-padded)
    b1_ref : (1, Hp)         f32
    w2_ref : (Hp, Dp)        f32/bf16
    b2_ref : (1, Dp)         f32
    out_ref: (TILE_B, Dp)    f32       (lane-dense padded output)
    """
    w1 = w1_ref[...]
    # fc1 + relu (MXU matmul, f32 accumulation). Cast x to the weight dtype so
    # both MXU operands match (no-op for f32 params, bf16 cast otherwise).
    h = jnp.dot(x_ref[...].astype(w1.dtype), w1,
                preferred_element_type=jnp.float32) + b1_ref[...]
    h = jnp.maximum(h, 0.0)
    # fc2
    y = jnp.dot(h.astype(w2_ref.dtype), w2_ref[...],
                preferred_element_type=jnp.float32) + b2_ref[...]
    out_ref[...] = y.astype(out_ref.dtype)


def prepare_params(w1, b1, w2, b2, param_dtype=jnp.float32):
    """One-time layout conversion from PyTorch nn.Linear layout.

    w1: (H, D_in), b1: (H,), w2: (D_out, H), b2: (D_out,)
    Returns kernel-ready params:
      w1p: (D_in, Hp), b1p: (1, Hp), w2p: (Hp, Dp), b2p: (1, Dp), d_out
    where Hp/Dp are padded up to multiples of 128 (lane-dense). Padded hidden
    columns have zero weight and zero bias (relu(0)=0) and the corresponding
    w2 rows are zero, so the math is unchanged.
    """
    h_dim, d_in = w1.shape
    d_out, _ = w2.shape
    hp = _round_up(h_dim, _LANE)
    dp = _round_up(d_out, _LANE)

    w1p = jnp.zeros((d_in, hp), param_dtype).at[:, :h_dim].set(
        w1.T.astype(param_dtype))
    b1p = jnp.zeros((1, hp), jnp.float32).at[:, :h_dim].set(
        b1.astype(jnp.float32))
    w2p = jnp.zeros((hp, dp), param_dtype).at[:h_dim, :d_out].set(
        w2.T.astype(param_dtype))
    b2p = jnp.zeros((1, dp), jnp.float32).at[:, :d_out].set(
        b2.astype(jnp.float32))
    return w1p, b1p, w2p, b2p, d_out


@functools.partial(jax.jit, static_argnames=("d_out",))
def linear_qnet_forward(x, w1p, b1p, w2p, b2p, *, d_out):
    """x: (B, D_in) f32, prepared params from `prepare_params`. Returns (B, D_out)."""
    B, d_in = x.shape
    hp = w1p.shape[1]
    dp = w2p.shape[1]

    # Batch tile: multiple of the f32 sublane (8), capped at 128. At these Q-net
    # sizes VMEM pressure is negligible even on v7x (64 MiB physical).
    tile_b = min(_LANE, _round_up(B, _SUBLANE))
    grid = (pl.cdiv(B, tile_b),)

    y_pad = pl.pallas_call(
        _mlp_kernel,
        out_shape=jax.ShapeDtypeStruct((B, dp), x.dtype),
        grid=grid,
        in_specs=[
            # x: new batch tile each grid step (pipelined DMA).
            pl.BlockSpec((tile_b, d_in), lambda i: (i, 0)),
            # Weights / biases: whole-array, VMEM-resident across steps.
            pl.BlockSpec((d_in, hp), lambda i: (0, 0)),
            pl.BlockSpec((1, hp), lambda i: (0, 0)),
            pl.BlockSpec((hp, dp), lambda i: (0, 0)),
            pl.BlockSpec((1, dp), lambda i: (0, 0)),
        ],
        # Lane-dense padded output (Dp is a multiple of 128 -> unmasked stores).
        out_specs=pl.BlockSpec((tile_b, dp), lambda i: (i, 0)),
        compiler_params=pltpu.CompilerParams(
            dimension_semantics=("parallel",)),
    )(x, w1p, b1p, w2p, b2p)

    # Strip the lane padding back to the true output width.
    return y_pad[:, :d_out]


def _torch_linear_init(key, out_features, in_features, dtype=jnp.float32):
    """Deterministic init matching nn.Linear's default: U(-1/sqrt(fan_in), ...)."""
    k_w, k_b = jax.random.split(key)
    bound = 1.0 / jnp.sqrt(jnp.asarray(in_features, dtype))
    w = jax.random.uniform(k_w, (out_features, in_features), dtype,
                           minval=-bound, maxval=bound)
    b = jax.random.uniform(k_b, (out_features,), dtype,
                           minval=-bound, maxval=bound)
    return w, b


if __name__ == "__main__":
    # Small shapes consistent with the module (snake-game-style Q-net sizes).
    input_dim, hidden_dim, output_dim = 16, 32, 4

    key = jax.random.PRNGKey(0)
    k_x1, k_x2, k_fc1, k_fc2 = jax.random.split(key, 4)

    w1, b1 = _torch_linear_init(k_fc1, hidden_dim, input_dim)
    w2, b2 = _torch_linear_init(k_fc2, output_dim, hidden_dim)

    # --- Check 1: small batch, f32 params (exact vs. pure-JAX reference) ----
    batch = 8
    x = jax.random.normal(k_x1, (batch, input_dim), jnp.float32)
    params_f32 = prepare_params(w1, b1, w2, b2, param_dtype=jnp.float32)
    out = linear_qnet_forward(x, *params_f32[:4], d_out=params_f32[4])
    out = jax.block_until_ready(out)
    ref = jnp.maximum(x @ w1.T + b1, 0.0) @ w2.T + b2
    assert out.shape == (batch, output_dim)
    assert jnp.allclose(out, ref, atol=1e-5, rtol=1e-5)

    # --- Check 2: larger batch (multi-step grid), bf16 weights --------------
    batch2 = 256
    x2 = jax.random.normal(k_x2, (batch2, input_dim), jnp.float32)
    params_bf16 = prepare_params(w1, b1, w2, b2, param_dtype=jnp.bfloat16)
    out2 = linear_qnet_forward(x2, *params_bf16[:4], d_out=params_bf16[4])
    out2 = jax.block_until_ready(out2)
    # Reference using the same bf16-rounded operands the kernel sees.
    xb = x2.astype(jnp.bfloat16).astype(jnp.float32)
    w1b = w1.astype(jnp.bfloat16).astype(jnp.float32)
    w2b = w2.astype(jnp.bfloat16).astype(jnp.float32)
    hb = jnp.maximum(xb @ w1b.T + b1, 0.0).astype(jnp.bfloat16).astype(jnp.float32)
    ref2 = hb @ w2b.T + b2
    assert out2.shape == (batch2, output_dim)
    assert jnp.allclose(out2, ref2, atol=1e-3, rtol=1e-3)

    print("KERNEL_OK")
</pallas_src>

<mosaic_0001>
module attributes {stable_mosaic.version = 11 : i64} {
  func.func @_mlp_kernel(%arg0: i32, %arg1: memref<8x16xf32, #tpu.memory_space<vmem>>, %arg2: memref<16x128xf32, #tpu.memory_space<vmem>>, %arg3: memref<1x128xf32, #tpu.memory_space<vmem>>, %arg4: memref<128x128xf32, #tpu.memory_space<vmem>>, %arg5: memref<1x128xf32, #tpu.memory_space<vmem>>, %arg6: memref<8x128xf32, #tpu.memory_space<vmem>>) attributes {dimension_semantics = [#tpu.dimension_semantics<parallel>], iteration_bounds = array<i64: 1>, scalar_prefetch = 0 : i64, scratch_operands = 0 : i64, tpu.core_type = #tpu.core_type<tc>, window_params = [{transform_indices = @transform_0, window_bounds = array<i64: 8, 16>}, {pipeline_mode = #tpu.pipeline_mode<synchronous>, transform_indices = @transform_1, window_bounds = array<i64: 16, 128>}, {pipeline_mode = #tpu.pipeline_mode<synchronous>, transform_indices = @transform_2, window_bounds = array<i64: 1, 128>}, {pipeline_mode = #tpu.pipeline_mode<synchronous>, transform_indices = @transform_3, window_bounds = array<i64: 128, 128>}, {pipeline_mode = #tpu.pipeline_mode<synchronous>, transform_indices = @transform_4, window_bounds = array<i64: 1, 128>}, {transform_indices = @transform_5, window_bounds = array<i64: 8, 128>}]} {
    %c0 = arith.constant 0 : index
    %c0_0 = arith.constant 0 : index
    %0 = vector.load %arg2[%c0, %c0_0] : memref<16x128xf32, #tpu.memory_space<vmem>>, vector<16x128xf32>
    %c0_1 = arith.constant 0 : index
    %c0_2 = arith.constant 0 : index
    %1 = vector.load %arg1[%c0_1, %c0_2] : memref<8x16xf32, #tpu.memory_space<vmem>>, vector<8x16xf32>
    %cst = arith.constant dense<0.000000e+00> : vector<8x128xf32>
    %2 = tpu.matmul %1, %0, %cst {dimension_numbers = #tpu.dot_dimension_numbers<[1], [0], [0], [1], [0, 0, 1, 1], [], []>} : vector<8x16xf32>, vector<16x128xf32>, vector<8x128xf32> -> vector<8x128xf32>
    %c0_3 = arith.constant 0 : index
    %c0_4 = arith.constant 0 : index
    %3 = vector.load %arg3[%c0_3, %c0_4] : memref<1x128xf32, #tpu.memory_space<vmem>>, vector<1x128xf32>
    %4 = vector.broadcast %3 : vector<1x128xf32> to vector<8x128xf32>
    %5 = arith.addf %2, %4 : vector<8x128xf32>
    %cst_5 = arith.constant 0.000000e+00 : f32
    %6 = vector.broadcast %cst_5 : f32 to vector<8x128xf32>
    %7 = arith.maximumf %5, %6 : vector<8x128xf32>
    %c0_6 = arith.constant 0 : index
    %c0_7 = arith.constant 0 : index
    %8 = vector.load %arg4[%c0_6, %c0_7] : memref<128x128xf32, #tpu.memory_space<vmem>>, vector<128x128xf32>
    %cst_8 = arith.constant dense<0.000000e+00> : vector<8x128xf32>
    %9 = tpu.matmul %7, %8, %cst_8 {dimension_numbers = #tpu.dot_dimension_numbers<[1], [0], [0], [1], [0, 0, 1, 1], [], []>} : vector<8x128xf32>, vector<128x128xf32>, vector<8x128xf32> -> vector<8x128xf32>
    %c0_9 = arith.constant 0 : index
    %c0_10 = arith.constant 0 : index
    %10 = vector.load %arg5[%c0_9, %c0_10] : memref<1x128xf32, #tpu.memory_space<vmem>>, vector<1x128xf32>
    %11 = vector.broadcast %10 : vector<1x128xf32> to vector<8x128xf32>
    %12 = arith.addf %9, %11 : vector<8x128xf32>
    %c0_11 = arith.constant 0 : index
    %c0_12 = arith.constant 0 : index
    %13 = vector.load %arg6[%c0_11, %c0_12] : memref<8x128xf32, #tpu.memory_space<vmem>>, vector<8x128xf32>
    tpu.vector_store %arg6[%c0_11, %c0_12], %12 {strides = array<i32>} : memref<8x128xf32, #tpu.memory_space<vmem>>, vector<8x128xf32>,
    return
  }
  func.func @transform_0(%arg0: i32) -> (i32, i32) {
    %c0_i32 = arith.constant 0 : i32
    %c0_i32_0 = arith.constant 0 : i32
    return %arg0, %c0_i32 : i32, i32
  }
  func.func @transform_1(%arg0: i32) -> (i32, i32) {
    %c0_i32 = arith.constant 0 : i32
    %c0_i32_0 = arith.constant 0 : i32
    %c0_i32_1 = arith.constant 0 : i32
    return %c0_i32, %c0_i32_0 : i32, i32
  }
  func.func @transform_2(%arg0: i32) -> (i32, i32) {
    %c0_i32 = arith.constant 0 : i32
    %c0_i32_0 = arith.constant 0 : i32
    %c0_i32_1 = arith.constant 0 : i32
    return %c0_i32, %c0_i32_0 : i32, i32
  }
  func.func @transform_3(%arg0: i32) -> (i32, i32) {
    %c0_i32 = arith.constant 0 : i32
    %c0_i32_0 = arith.constant 0 : i32
    %c0_i32_1 = arith.constant 0 : i32
    return %c0_i32, %c0_i32_0 : i32, i32
  }
  func.func @transform_4(%arg0: i32) -> (i32, i32) {
    %c0_i32 = arith.constant 0 : i32
    %c0_i32_0 = arith.constant 0 : i32
    %c0_i32_1 = arith.constant 0 : i32
    return %c0_i32, %c0_i32_0 : i32, i32
  }
  func.func @transform_5(%arg0: i32) -> (i32, i32) {
    %c0_i32 = arith.constant 0 : i32
    %c0_i32_0 = arith.constant 0 : i32
    return %arg0, %c0_i32 : i32, i32
  }
}

</mosaic_0001>

<llo_original>
// kernel: linear_qnet_forward.1
$region0: #{linear_qnet_forward.1}
  #allocation0 [shape = 'u32[]', space=smem, size = 0x4, offset = 0x4, fixed_abs, tag = 'smem constant byte address 0x4 - core index']
  #allocation1 [shape = 'u32[144,128]{1,0:T(1,128)}', space=vmem, size = 0x12000, scoped, tag = 'internal scratch']
  %s0 = inlined_call_operand.hbm [shape: f32[8,16], index: 0, kind: input, shape index: {}]
  %s1 = inlined_call_operand.hbm [shape: f32[16,128], index: 1, kind: input, shape index: {}]
  %s2 = inlined_call_operand.vmem [shape: f32[1,128], index: 2, kind: input, shape index: {}]
  %s3 = inlined_call_operand.hbm [shape: f32[128,128], index: 3, kind: input, shape index: {}]
  %s4 = inlined_call_operand.vmem [shape: f32[1,128], index: 4, kind: input, shape index: {}]
  %s5 = inlined_call_operand.vmem [shape: f32[8,128], index: 5, kind: output, shape index: {}]
  %s6 = sld [smem:[#allocation0]]
  $region42: #{linear_qnet_forward.1} parent=0
    _
  %s8 = ssub.s32 1, %s6
  %s9 = scalar_select 0, %s8, %s6
  $region1: #{linear_qnet_forward.1} parent=0
    #allocation2 [shape = 'u8[4096]{0}', space=vmem, size = 0x1000, scoped, tag = 'input window, operand 0, single buffered']
    #allocation3 [shape = 's32[1]{0}', space=sflag, size = 0x4, scoped, tag = 'scoped memory for linear_qnet_forward.1']
    #allocation4 [shape = 'u8[8192]{0}', space=vmem, size = 0x2000, scoped, tag = 'input window, operand 1, single buffered']
    #allocation5 [shape = 's32[1]{0}', space=sflag, size = 0x4, scoped, tag = 'scoped memory for linear_qnet_forward.1']
    #allocation6 [shape = 'u8[65536]{0}', space=vmem, size = 0x10000, scoped, tag = 'input window, operand 3, single buffered']
    %10 = vsyncpa [#allocation3], 0
    %11 = vsyncpa [#allocation5], 0
    // Predicated region
    $region2: #{linear_qnet_forward.1} parent=1 // pred_check
      _
    $region3: #{linear_qnet_forward.1} parent=1 // pred_check_branch
      %13 = sbr.rel (0) target = $region5
    $region4: #{linear_qnet_forward.1} parent=1 // pred_region
      %s15 = ssub.s32 128, 128
      %16 = vsyncadd [#allocation3], %s15
      %s18 = sshll.u32 [#allocation2], 4
      %s19 = int_to_ptr.vmem [resolvable:$true] %s18
      %21 = dma.hbm_to_vmem [thread:$0]  %s0, 128, %s19, [#allocation3]
    $region5: #{linear_qnet_forward.1} parent=1 // pred_fallthru
      _
    // Predicated region
    $region6: #{linear_qnet_forward.1} parent=1 // pred_check
      _
    $region7: #{linear_qnet_forward.1} parent=1 // pred_check_branch
      %23 = sbr.rel (0) target = $region9
    $region8: #{linear_qnet_forward.1} parent=1 // pred_region
      %s25 = ssub.s32 256, 256
      %26 = vsyncadd [#allocation5], %s25
      %s27 = sshll.u32 [#allocation4], 4
      %s28 = int_to_ptr.vmem [resolvable:$true] %s27
      %33 = dma.hbm_to_vmem [thread:$0]  %s1, 256, %s28, [#allocation5], 128, 128, 8
    $region9: #{linear_qnet_forward.1} parent=1 // pred_fallthru
      _
    // Predicated region
    $region10: #{linear_qnet_forward.1} parent=1 // pred_check
      _
    $region11: #{linear_qnet_forward.1} parent=1 // pred_check_branch
      %35 = sbr.rel (0) target = $region13
    $region12: #{linear_qnet_forward.1} parent=1 // pred_region
      _
    $region13: #{linear_qnet_forward.1} parent=1 // pred_fallthru
      _
    // Predicated region
    $region14: #{linear_qnet_forward.1} parent=1 // pred_check
      _
    $region15: #{linear_qnet_forward.1} parent=1 // pred_check_branch
      %37 = sbr.rel (0) target = $region17
    $region16: #{linear_qnet_forward.1} parent=1 // pred_region
      %s39 = ssub.s32 2048, 2048
      %40 = vsyncadd [#allocation5], %s39
      %s41 = sshll.u32 [#allocation6], 4
      %s42 = int_to_ptr.vmem [resolvable:$true] %s41
      %47 = dma.hbm_to_vmem [thread:$0]  %s3, 2048, %s42, [#allocation5], 128, 128, 8
    $region17: #{linear_qnet_forward.1} parent=1 // pred_fallthru
      _
    // Predicated region
    $region18: #{linear_qnet_forward.1} parent=1 // pred_check
      _
    $region19: #{linear_qnet_forward.1} parent=1 // pred_check_branch
      %49 = sbr.rel (0) target = $region21
    $region20: #{linear_qnet_forward.1} parent=1 // pred_region
      _
    $region21: #{linear_qnet_forward.1} parent=1 // pred_fallthru
      _
    // Predicated region
    $region22: #{linear_qnet_forward.1} parent=1 // pred_check
      _
    $region23: #{linear_qnet_forward.1} parent=1 // pred_check_branch
      %51 = sbr.rel (0) target = $region25
    $region24: #{linear_qnet_forward.1} parent=1 // pred_region
      %52 = dma.done [#allocation3], 128
    $region25: #{linear_qnet_forward.1} parent=1 // pred_fallthru
      _
    // Predicated region
    $region26: #{linear_qnet_forward.1} parent=1 // pred_check
      _
    $region27: #{linear_qnet_forward.1} parent=1 // pred_check_branch
      %54 = sbr.rel (0) target = $region29
    $region28: #{linear_qnet_forward.1} parent=1 // pred_region
      %55 = dma.done [#allocation5], 256
    $region29: #{linear_qnet_forward.1} parent=1 // pred_fallthru
      _
    // Predicated region
    $region30: #{linear_qnet_forward.1} parent=1 // pred_check
      _
    $region31: #{linear_qnet_forward.1} parent=1 // pred_check_branch
      %57 = sbr.rel (0) target = $region33
    $region32: #{linear_qnet_forward.1} parent=1 // pred_region
      %58 = dma.done [#allocation5], 2048
    $region33: #{linear_qnet_forward.1} parent=1 // pred_fallthru
      _
    %v59 = vld [vmem:[#allocation4] sm:$0xff]
    %v60 = vld [vmem:[#allocation4 + $0x8] sm:$0xff]
    %v61 = vld [vmem:[#allocation2] sm:$0xff]
    %v62 = vld [vmem:[%s2] sm:$0x1]
    %v64 = vlaneseq
    %v65 = vshrl.u32 %v64, 7
    %v66 = vsub.s32 0, %v65
    %v67 = vrot.slane %v62, %v66
    %vm69 = vcmask 130048
    %v71 = vsel %vm69, %v61, 0
    %73 = vmatprep.subr.mxu0 0.0
    %74 = vmatpush1.msra.mxu0 %v59
    %75 = vmatprep.subr.mxu0 0.0
    %76 = vmatpush1.msra.mxu0 %v60
    %77 = vmatprep.subr.mxu0 0.0
    %78 = vmatpush1.msra.mxu0 0.0
    %79 = vmatprep.subr.mxu0 0.0
    %80 = vmatpush1.msra.mxu0 0.0
    %81 = vmatprep.subr.mxu0 0.0
    %82 = vmatpush1.msra.mxu0 0.0
    %83 = vmatprep.subr.mxu0 0.0
    %84 = vmatpush1.msra.mxu0 0.0
    %85 = vmatprep.subr.mxu0 0.0
    %86 = vmatpush1.msra.mxu0 0.0
    %87 = vmatprep.subr.mxu0 0.0
    %88 = vmatpush1.msra.mxu0 0.0
    %89 = vmatprep.subr.mxu0 0.0
    %90 = vmatpush1.msra.mxu0 0.0
    %91 = vmatprep.subr.mxu0 0.0
    %92 = vmatpush1.msra.mxu0 0.0
    %93 = vmatprep.subr.mxu0 0.0
    %94 = vmatpush1.msra.mxu0 0.0
    %95 = vmatprep.subr.mxu0 0.0
    %96 = vmatpush1.msra.mxu0 0.0
    %97 = vmatprep.subr.mxu0 0.0
    %98 = vmatpush1.msra.mxu0 0.0
    %99 = vmatprep.subr.mxu0 0.0
    %100 = vmatpush1.msra.mxu0 0.0
    %101 = vmatprep.subr.mxu0 0.0
    %102 = vmatpush1.msra.mxu0 0.0
    %103 = vmatprep.subr.mxu0 0.0
    %104 = vmatpush1.msra.mxu0 0.0
    %105 = vmatprep.subr.mxu0 0.0
    %106 = vmatpush1.msra.mxu0 0.0
    %107 = vmatprep.subr.mxu0 0.0
    %108 = vmatpush1.msra.mxu0 0.0
    %109 = vmatprep.subr.mxu0 0.0
    %110 = vmatpush1.msra.mxu0 0.0
    %111 = vmatprep.subr.mxu0 0.0
    %112 = vmatpush1.msra.mxu0 0.0
    %113 = vmatprep.subr.mxu0 0.0
    %114 = vmatpush1.msra.mxu0 0.0
    %115 = vmatprep.subr.mxu0 0.0
    %116 = vmatpush1.msra.mxu0 0.0
    %117 = vmatprep.subr.mxu0 0.0
    %118 = vmatpush1.msra.mxu0 0.0
    %119 = vmatprep.subr.mxu0 0.0
    %120 = vmatpush1.msra.mxu0 0.0
    %121 = vmatprep.subr.mxu0 0.0
    %122 = vmatpush1.msra.mxu0 0.0
    %123 = vmatprep.subr.mxu0 0.0
    %124 = vmatpush1.msra.mxu0 0.0
    %125 = vmatprep.subr.mxu0 0.0
    %126 = vmatpush1.msra.mxu0 0.0
    %127 = vmatprep.subr.mxu0 0.0
    %128 = vmatpush1.msra.mxu0 0.0
    %129 = vmatprep.subr.mxu0 0.0
    %130 = vmatpush1.msra.mxu0 0.0
    %131 = vmatprep.subr.mxu0 0.0
    %132 = vmatpush1.msra.mxu0 0.0
    %133 = vmatprep.subr.mxu0 0.0
    %134 = vmatpush1.msra.mxu0 0.0
    %135 = vmatprep.subr.mxu0 0.0
    %136 = vmatpush1.msra.mxu0 0.0
    %137 = vmatprep.mubr.f32.mxu0 0.0
    %138 = vmatmul.mubr.f32.gmra.mrb[0].mxu0 %v71
    %v139 = vpop.f32.mrb[0].mxu0
    %v140 = vadd.f32 %v67, %v139
    %v141 = vpop.f32.mrb[0].mxu0
    %142 = vdwg.mxu0
    %v143 = vmax.f32 %v140, 0.0
    %v144 = vld [vmem:[#allocation6] sm:$0xff]
    %v145 = vld [vmem:[#allocation6 + $0x8] sm:$0xff]
    %v146 = vld [vmem:[#allocation6 + $0x10] sm:$0xff]
    %v147 = vld [vmem:[#allocation6 + $0x18] sm:$0xff]
    %v148 = vld [vmem:[#allocation6 + $0x20] sm:$0xff]
    %v149 = vld [vmem:[#allocation6 + $0x28] sm:$0xff]
    %v150 = vld [vmem:[#allocation6 + $0x30] sm:$0xff]
    %v151 = vld [vmem:[#allocation6 + $0x38] sm:$0xff]
    %v152 = vld [vmem:[#allocation6 + $0x40] sm:$0xff]
    %v153 = vld [vmem:[#allocation6 + $0x48] sm:$0xff]
    %v154 = vld [vmem:[#allocation6 + $0x50] sm:$0xff]
    %v155 = vld [vmem:[#allocation6 + $0x58] sm:$0xff]
    %v156 = vld [vmem:[#allocation6 + $0x60] sm:$0xff]
    %v157 = vld [vmem:[#allocation6 + $0x68] sm:$0xff]
    %v158 = vld [vmem:[#allocation6 + $0x70] sm:$0xff]
    %v159 = vld [vmem:[#allocation6 + $0x78] sm:$0xff]
    %v160 = vld [vmem:[%s4] sm:$0x1]
    %v162 = vlaneseq
    %v163 = vshrl.u32 %v162, 7
    %v164 = vsub.s32 0, %v163
    %v165 = vrot.slane %v160, %v164
    %167 = vmatprep.subr.mxu0 0.0
    %168 = vmatpush1.msra.mxu0 %v144
    %169 = vmatprep.subr.mxu0 0.0
    %170 = vmatpush1.msra.mxu0 %v145
    %171 = vmatprep.subr.mxu0 0.0
    %172 = vmatpush1.msra.mxu0 %v146
    %173 = vmatprep.subr.mxu0 0.0
    %174 = vmatpush1.msra.mxu0 %v147
    %175 = vmatprep.subr.mxu0 0.0
    %176 = vmatpush1.msra.mxu0 %v148
    %177 = vmatprep.subr.mxu0 0.0
    %178 = vmatpush1.msra.mxu0 %v149
    %179 = vmatprep.subr.mxu0 0.0
    %180 = vmatpush1.msra.mxu0 %v150
    %181 = vmatprep.subr.mxu0 0.0
    %182 = vmatpush1.msra.mxu0 %v151
    %183 = vmatprep.subr.mxu0 0.0
    %184 = vmatpush1.msra.mxu0 %v152
    %185 = vmatprep.subr.mxu0 0.0
    %186 = vmatpush1.msra.mxu0 %v153
    %187 = vmatprep.subr.mxu0 0.0
    %188 = vmatpush1.msra.mxu0 %v154
    %189 = vmatprep.subr.mxu0 0.0
    %190 = vmatpush1.msra.mxu0 %v155
    %191 = vmatprep.subr.mxu0 0.0
    %192 = vmatpush1.msra.mxu0 %v156
    %193 = vmatprep.subr.mxu0 0.0
    %194 = vmatpush1.msra.mxu0 %v157
    %195 = vmatprep.subr.mxu0 0.0
    %196 = vmatpush1.msra.mxu0 %v158
    %197 = vmatprep.subr.mxu0 0.0
    %198 = vmatpush1.msra.mxu0 %v159
    %199 = vmatprep.subr.mxu0 0.0
    %200 = vmatpush1.msra.mxu0 0.0
    %201 = vmatprep.subr.mxu0 0.0
    %202 = vmatpush1.msra.mxu0 0.0
    %203 = vmatprep.subr.mxu0 0.0
    %204 = vmatpush1.msra.mxu0 0.0
    %205 = vmatprep.subr.mxu0 0.0
    %206 = vmatpush1.msra.mxu0 0.0
    %207 = vmatprep.subr.mxu0 0.0
    %208 = vmatpush1.msra.mxu0 0.0
    %209 = vmatprep.subr.mxu0 0.0
    %210 = vmatpush1.msra.mxu0 0.0
    %211 = vmatprep.subr.mxu0 0.0
    %212 = vmatpush1.msra.mxu0 0.0
    %213 = vmatprep.subr.mxu0 0.0
    %214 = vmatpush1.msra.mxu0 0.0
    %215 = vmatprep.subr.mxu0 0.0
    %216 = vmatpush1.msra.mxu0 0.0
    %217 = vmatprep.subr.mxu0 0.0
    %218 = vmatpush1.msra.mxu0 0.0
    %219 = vmatprep.subr.mxu0 0.0
    %220 = vmatpush1.msra.mxu0 0.0
    %221 = vmatprep.subr.mxu0 0.0
    %222 = vmatpush1.msra.mxu0 0.0
    %223 = vmatprep.subr.mxu0 0.0
    %224 = vmatpush1.msra.mxu0 0.0
    %225 = vmatprep.subr.mxu0 0.0
    %226 = vmatpush1.msra.mxu0 0.0
    %227 = vmatprep.subr.mxu0 0.0
    %228 = vmatpush1.msra.mxu0 0.0
    %229 = vmatprep.subr.mxu0 0.0
    %230 = vmatpush1.msra.mxu0 0.0
    %231 = vmatprep.mubr.f32.mxu0 0.0
    %232 = vmatmul.mubr.f32.gmra.mrb[0].mxu0 %v143
    %v233 = vpop.f32.mrb[0].mxu0
    %v234 = vadd.f32 %v165, %v233
    %v235 = vpop.f32.mrb[0].mxu0
    %236 = vdwg.mxu0
    %237 = vst [vmem:[%s5] sm:$0xff] %v234
    // Predicated region
    $region34: #{linear_qnet_forward.1} parent=1 // pred_check
      _
    $region35: #{linear_qnet_forward.1} parent=1 // pred_check_branch
      %239 = sbr.rel (0) target = $region37
    $region36: #{linear_qnet_forward.1} parent=1 // pred_region
      _
    $region37: #{linear_qnet_forward.1} parent=1 // pred_fallthru
      _
    // Predicated region
    $region38: #{linear_qnet_forward.1} parent=1 // pred_check
      _
    $region39: #{linear_qnet_forward.1} parent=1 // pred_check_branch
      %241 = sbr.rel (0) target = $region41
    $region40: #{linear_qnet_forward.1} parent=1 // pred_region
      _
    $region41: #{linear_qnet_forward.1} parent=1 // pred_fallthru
      _
    %242 = vsyncpa [#allocation3], 1
    %243 = vsyncpa [#allocation5], 1

</llo_original>
